<compile_context>
chip_gen: v6e
topology: v6e:2x2x1
jax: 0.10.0
libtpu: 0.0.40
codegen_flags: <defaults>
</compile_context>

<pallas_src>
import jax
import jax.numpy as jnp
from jax.experimental import pallas as pl
from jax.experimental.pallas import tpu as pltpu

_LANE = 128
_SUBLANE = 8
_VMEM_LIMIT = 48 * 1024 * 1024


def _round_up(x, m):
    return (x + m - 1) // m * m


# ---------------------------------------------------------------------------
# Small-graph fast path: both GraphConv layers fused into one VMEM-resident
# kernel.
# ---------------------------------------------------------------------------
def _fused_gcn2_kernel(ahat_ref, x_ref, w1_ref, b1_ref, w2_ref, b2_ref, out_ref):
    # Layer 1: H = relu(Ahat @ (X @ W1) + b1)
    xw1 = jnp.dot(x_ref[...], w1_ref[...], preferred_element_type=jnp.float32)
    h = jnp.dot(
        ahat_ref[...], xw1.astype(jnp.bfloat16), preferred_element_type=jnp.float32
    )
    h = jnp.maximum(h + b1_ref[...], 0.0).astype(jnp.bfloat16)
    # Layer 2: OUT = Ahat @ (H @ W2) + b2
    hw2 = jnp.dot(h, w2_ref[...], preferred_element_type=jnp.float32)
    out = jnp.dot(
        ahat_ref[...], hw2.astype(jnp.bfloat16), preferred_element_type=jnp.float32
    )
    out_ref[...] = (out + b2_ref[...]).astype(out_ref.dtype)


def _fused_small(ahat_p, x_p, w1_p, b1_p, w2_p, b2_p):
    n_pad = ahat_p.shape[0]
    fin_p = x_p.shape[1]
    hid_p = w1_p.shape[1]
    fout_p = w2_p.shape[1]
    return pl.pallas_call(
        _fused_gcn2_kernel,
        out_shape=jax.ShapeDtypeStruct((n_pad, fout_p), jnp.float32),
        grid_spec=pltpu.PrefetchScalarGridSpec(
            num_scalar_prefetch=0,
            grid=(1,),
            in_specs=[
                pl.BlockSpec((n_pad, n_pad), lambda i: (0, 0)),
                pl.BlockSpec((n_pad, fin_p), lambda i: (0, 0)),
                pl.BlockSpec((fin_p, hid_p), lambda i: (0, 0)),
                pl.BlockSpec((1, hid_p), lambda i: (0, 0)),
                pl.BlockSpec((hid_p, fout_p), lambda i: (0, 0)),
                pl.BlockSpec((1, fout_p), lambda i: (0, 0)),
            ],
            out_specs=pl.BlockSpec((n_pad, fout_p), lambda i: (0, 0)),
        ),
        compiler_params=pltpu.CompilerParams(
            dimension_semantics=("arbitrary",),
            vmem_limit_bytes=_VMEM_LIMIT,
        ),
    )(ahat_p, x_p, w1_p, b1_p, w2_p, b2_p)


# ---------------------------------------------------------------------------
# Tiled path, kernel A: lane-dense feature transform  XW = X @ W  (bf16 out).
# ---------------------------------------------------------------------------
def _feature_transform_kernel(x_ref, w_ref, out_ref):
    out_ref[...] = jnp.dot(
        x_ref[...], w_ref[...], preferred_element_type=jnp.float32
    ).astype(out_ref.dtype)


def _feature_transform(x_p, w_p, *, tm):
    n_pad, fin_p = x_p.shape
    f_out = w_p.shape[1]
    return pl.pallas_call(
        _feature_transform_kernel,
        out_shape=jax.ShapeDtypeStruct((n_pad, f_out), jnp.bfloat16),
        grid_spec=pltpu.PrefetchScalarGridSpec(
            num_scalar_prefetch=0,
            grid=(n_pad // tm,),
            in_specs=[
                pl.BlockSpec((tm, fin_p), lambda i: (i, 0)),      # X row tile
                pl.BlockSpec((fin_p, f_out), lambda i: (0, 0)),   # W: constant
            ],
            out_specs=pl.BlockSpec((tm, f_out), lambda i: (i, 0)),
        ),
        compiler_params=pltpu.CompilerParams(
            dimension_semantics=("parallel",),
            vmem_limit_bytes=_VMEM_LIMIT,
        ),
    )(x_p, w_p)


# ---------------------------------------------------------------------------
# Tiled path, kernel B:  G = relu(Ahat @ XW1 + b1) @ W2   (bf16 out).
# Layer 2's feature transform is fused into layer 1's finalize branch.
# ---------------------------------------------------------------------------
def _aggregate_relu_post_kernel(ahat_ref, xw_ref, b_ref, wpost_ref, out_ref, acc_ref):
    k = pl.program_id(1)

    @pl.when(k == 0)
    def _init():
        acc_ref[...] = jnp.zeros_like(acc_ref)

    acc_ref[...] += jnp.dot(
        ahat_ref[...], xw_ref[...], preferred_element_type=jnp.float32
    )

    @pl.when(k == pl.num_programs(1) - 1)
    def _finalize():
        h = jnp.maximum(acc_ref[...] + b_ref[...], 0.0).astype(jnp.bfloat16)
        out_ref[...] = jnp.dot(
            h, wpost_ref[...], preferred_element_type=jnp.float32
        ).astype(out_ref.dtype)


def _aggregate_relu_post(ahat_p, xw1, b1_p, w2_p, *, tm, tk):
    n_pad = ahat_p.shape[0]
    hid_p = xw1.shape[1]
    fout_p = w2_p.shape[1]
    return pl.pallas_call(
        _aggregate_relu_post_kernel,
        out_shape=jax.ShapeDtypeStruct((n_pad, fout_p), jnp.bfloat16),
        grid_spec=pltpu.PrefetchScalarGridSpec(
            num_scalar_prefetch=0,
            grid=(n_pad // tm, n_pad // tk),
            in_specs=[
                pl.BlockSpec((tm, tk), lambda i, k: (i, k)),        # Ahat tile (streamed)
                pl.BlockSpec((tk, hid_p), lambda i, k: (k, 0)),     # XW1 k block
                pl.BlockSpec((1, hid_p), lambda i, k: (0, 0)),      # b1: constant
                pl.BlockSpec((hid_p, fout_p), lambda i, k: (0, 0)), # W2: constant
            ],
            out_specs=pl.BlockSpec((tm, fout_p), lambda i, k: (i, 0)),
            scratch_shapes=[pltpu.VMEM((tm, hid_p), jnp.float32)],
        ),
        compiler_params=pltpu.CompilerParams(
            dimension_semantics=("parallel", "arbitrary"),
            vmem_limit_bytes=_VMEM_LIMIT,
        ),
    )(ahat_p, xw1, b1_p, w2_p)


# ---------------------------------------------------------------------------
# Tiled path, kernel C:  OUT = Ahat @ G + b2   (f32 out).
# ---------------------------------------------------------------------------
def _aggregate_bias_kernel(ahat_ref, g_ref, b_ref, out_ref, acc_ref):
    k = pl.program_id(1)

    @pl.when(k == 0)
    def _init():
        acc_ref[...] = jnp.zeros_like(acc_ref)

    acc_ref[...] += jnp.dot(
        ahat_ref[...], g_ref[...], preferred_element_type=jnp.float32
    )

    @pl.when(k == pl.num_programs(1) - 1)
    def _finalize():
        out_ref[...] = (acc_ref[...] + b_ref[...]).astype(out_ref.dtype)


def _aggregate_bias(ahat_p, g, b2_p, *, tm, tk):
    n_pad = ahat_p.shape[0]
    fout_p = g.shape[1]
    return pl.pallas_call(
        _aggregate_bias_kernel,
        out_shape=jax.ShapeDtypeStruct((n_pad, fout_p), jnp.float32),
        grid_spec=pltpu.PrefetchScalarGridSpec(
            num_scalar_prefetch=0,
            grid=(n_pad // tm, n_pad // tk),
            in_specs=[
                pl.BlockSpec((tm, tk), lambda i, k: (i, k)),      # Ahat tile (streamed)
                pl.BlockSpec((tk, fout_p), lambda i, k: (k, 0)),  # G k block
                pl.BlockSpec((1, fout_p), lambda i, k: (0, 0)),   # b2: constant
            ],
            out_specs=pl.BlockSpec((tm, fout_p), lambda i, k: (i, 0)),
            scratch_shapes=[pltpu.VMEM((tm, fout_p), jnp.float32)],
        ),
        compiler_params=pltpu.CompilerParams(
            dimension_semantics=("parallel", "arbitrary"),
            vmem_limit_bytes=_VMEM_LIMIT,
        ),
    )(ahat_p, g, b2_p)


def actor_forward(ahat, x, w1, b1, w2, b2, *, tile=512, fused_max_nodes=1024,
                  force_tiled=False):
    """Two-layer GCN forward (Actor.forward with conv_type='gcn')."""
    n = ahat.shape[0]
    out_feats = w2.shape[1]

    fin_p = _round_up(x.shape[1], _LANE)
    hid_p = _round_up(w1.shape[1], _LANE)
    fout_p = _round_up(out_feats, _LANE)

    use_fused = (not force_tiled) and n <= fused_max_nodes
    n_pad = _round_up(n, _SUBLANE) if use_fused else _round_up(n, tile)

    def pad2(a, rows, cols):
        return jnp.pad(a, ((0, rows - a.shape[0]), (0, cols - a.shape[1])))

    # bf16 into the MXU, f32 accumulation; biases stay f32 (applied on the accumulator).
    ahat_p = pad2(ahat, n_pad, n_pad).astype(jnp.bfloat16)
    x_p = pad2(x, n_pad, fin_p).astype(jnp.bfloat16)
    w1_p = pad2(w1, fin_p, hid_p).astype(jnp.bfloat16)
    w2_p = pad2(w2, hid_p, fout_p).astype(jnp.bfloat16)
    b1_p = pad2(b1, 1, hid_p).astype(jnp.float32)
    b2_p = pad2(b2, 1, fout_p).astype(jnp.float32)

    if use_fused:
        out = _fused_small(ahat_p, x_p, w1_p, b1_p, w2_p, b2_p)
    else:
        tm = tk = tile
        xw1 = _feature_transform(x_p, w1_p, tm=tm)                        # (n_pad, hid_p) bf16
        g = _aggregate_relu_post(ahat_p, xw1, b1_p, w2_p, tm=tm, tk=tk)   # (n_pad, fout_p) bf16
        out = _aggregate_bias(ahat_p, g, b2_p, tm=tm, tk=tk)              # (n_pad, fout_p) f32
    return out[:n, :out_feats]


if __name__ == "__main__":
    key = jax.random.PRNGKey(0)
    in_feats, hid_feats, out_feats = 8, 32, 8

    def build_graph(n):
        # Deterministic graph: symmetric ring + symmetric chords (all degrees > 0,
        # matching DGL GraphConv's allow_zero_in_degree=False requirement).
        ring = jnp.arange(n)
        chord = jnp.arange(0, n, 4)
        src = jnp.concatenate([ring, (ring + 1) % n, chord, (chord + n // 2) % n])
        dst = jnp.concatenate([(ring + 1) % n, ring, (chord + n // 2) % n, chord])
        A = jnp.zeros((n, n), jnp.float32).at[src, dst].set(1.0)  # A[u, v] = 1 for u->v
        out_deg = A.sum(axis=1)  # src-side degree
        in_deg = A.sum(axis=0)   # dst-side degree
        # Ahat[v, u] = indeg(v)^-1/2 * A[u, v] * outdeg(u)^-1/2  (DGL norm='both')
        return (in_deg[:, None] ** -0.5) * A.T * (out_deg[None, :] ** -0.5)

    # Deterministic parameter init (module __init__ shapes; synthetic, not a checkpoint).
    k1, k2, k3, kb1, kb2, kx1, kx2 = jax.random.split(key, 7)
    w1 = jax.random.normal(k1, (in_feats, hid_feats), jnp.float32) / jnp.sqrt(in_feats)
    b1 = 0.1 * jax.random.normal(kb1, (1, hid_feats), jnp.float32)
    w2 = jax.random.normal(k2, (hid_feats, out_feats), jnp.float32) / jnp.sqrt(hid_feats)
    b2 = 0.1 * jax.random.normal(kb2, (1, out_feats), jnp.float32)
    # self.linear = nn.Linear(hid_feats, out_feats) is defined but never used in forward();
    # initialized here only for parameter parity.
    lin_w = jax.random.normal(k3, (out_feats, hid_feats), jnp.float32) / jnp.sqrt(hid_feats)
    lin_b = jnp.zeros((out_feats,), jnp.float32)

    def ref_forward(ahat, x):
        h = jnp.maximum(ahat @ x @ w1 + b1, 0.0)
        return ahat @ h @ w2 + b2

    # --- small graph: fused VMEM-resident path ---
    N1 = 16
    ahat1 = build_graph(N1)
    x1 = jax.random.normal(kx1, (N1, in_feats), jnp.float32)
    out1 = jax.block_until_ready(actor_forward(ahat1, x1, w1, b1, w2, b2))
    ref1 = ref_forward(ahat1, x1)
    assert out1.shape == (N1, out_feats)
    assert jnp.allclose(out1, ref1, atol=5e-2, rtol=5e-2), (
        float(jnp.max(jnp.abs(out1 - ref1)))
    )

    # --- larger graph: streamed / tiled path (exercises the k-reduction grid) ---
    N2 = 160
    ahat2 = build_graph(N2)
    x2 = jax.random.normal(kx2, (N2, in_feats), jnp.float32)
    out2 = jax.block_until_ready(
        actor_forward(ahat2, x2, w1, b1, w2, b2, tile=128, force_tiled=True)
    )
    ref2 = ref_forward(ahat2, x2)
    assert out2.shape == (N2, out_feats)
    assert jnp.allclose(out2, ref2, atol=5e-2, rtol=5e-2), (
        float(jnp.max(jnp.abs(out2 - ref2)))
    )

    print("KERNEL_OK")
</pallas_src>

<mosaic_0001>
module attributes {stable_mosaic.version = 11 : i64} {
  func.func @_fused_gcn2_kernel(%arg0: i32, %arg1: memref<16x16xbf16, #tpu.memory_space<vmem>>, %arg2: memref<16x128xbf16, #tpu.memory_space<vmem>>, %arg3: memref<128x128xbf16, #tpu.memory_space<vmem>>, %arg4: memref<1x128xf32, #tpu.memory_space<vmem>>, %arg5: memref<128x128xbf16, #tpu.memory_space<vmem>>, %arg6: memref<1x128xf32, #tpu.memory_space<vmem>>, %arg7: memref<16x128xf32, #tpu.memory_space<vmem>>) attributes {dimension_semantics = [#tpu.dimension_semantics<arbitrary>], iteration_bounds = array<i64: 1>, scalar_prefetch = 0 : i64, scratch_operands = 0 : i64, tpu.core_type = #tpu.core_type<tc>, window_params = [{pipeline_mode = #tpu.pipeline_mode<synchronous>, transform_indices = @transform_0, window_bounds = array<i64: 16, 16>}, {pipeline_mode = #tpu.pipeline_mode<synchronous>, transform_indices = @transform_1, window_bounds = array<i64: 16, 128>}, {pipeline_mode = #tpu.pipeline_mode<synchronous>, transform_indices = @transform_2, window_bounds = array<i64: 128, 128>}, {pipeline_mode = #tpu.pipeline_mode<synchronous>, transform_indices = @transform_3, window_bounds = array<i64: 1, 128>}, {pipeline_mode = #tpu.pipeline_mode<synchronous>, transform_indices = @transform_4, window_bounds = array<i64: 128, 128>}, {pipeline_mode = #tpu.pipeline_mode<synchronous>, transform_indices = @transform_5, window_bounds = array<i64: 1, 128>}, {pipeline_mode = #tpu.pipeline_mode<synchronous>, transform_indices = @transform_6, window_bounds = array<i64: 16, 128>}]} {
    %c0 = arith.constant 0 : index
    %c0_0 = arith.constant 0 : index
    %0 = vector.load %arg2[%c0, %c0_0] : memref<16x128xbf16, #tpu.memory_space<vmem>>, vector<16x128xbf16>
    %c0_1 = arith.constant 0 : index
    %c0_2 = arith.constant 0 : index
    %1 = vector.load %arg3[%c0_1, %c0_2] : memref<128x128xbf16, #tpu.memory_space<vmem>>, vector<128x128xbf16>
    %cst = arith.constant dense<0.000000e+00> : vector<16x128xf32>
    %2 = tpu.matmul %0, %1, %cst {dimension_numbers = #tpu.dot_dimension_numbers<[1], [0], [0], [1], [0, 0, 1, 1], [], []>} : vector<16x128xbf16>, vector<128x128xbf16>, vector<16x128xf32> -> vector<16x128xf32>
    %c0_3 = arith.constant 0 : index
    %c0_4 = arith.constant 0 : index
    %3 = vector.load %arg1[%c0_3, %c0_4] : memref<16x16xbf16, #tpu.memory_space<vmem>>, vector<16x16xbf16>
    %4 = arith.truncf %2 : vector<16x128xf32> to vector<16x128xbf16>
    %cst_5 = arith.constant dense<0.000000e+00> : vector<16x128xf32>
    %5 = tpu.matmul %3, %4, %cst_5 {dimension_numbers = #tpu.dot_dimension_numbers<[1], [0], [0], [1], [0, 0, 1, 1], [], []>} : vector<16x16xbf16>, vector<16x128xbf16>, vector<16x128xf32> -> vector<16x128xf32>
    %c0_6 = arith.constant 0 : index
    %c0_7 = arith.constant 0 : index
    %6 = vector.load %arg4[%c0_6, %c0_7] : memref<1x128xf32, #tpu.memory_space<vmem>>, vector<1x128xf32>
    %7 = vector.broadcast %6 : vector<1x128xf32> to vector<16x128xf32>
    %8 = arith.addf %5, %7 : vector<16x128xf32>
    %cst_8 = arith.constant 0.000000e+00 : f32
    %9 = vector.broadcast %cst_8 : f32 to vector<16x128xf32>
    %10 = arith.maximumf %8, %9 : vector<16x128xf32>
    %11 = arith.truncf %10 : vector<16x128xf32> to vector<16x128xbf16>
    %c0_9 = arith.constant 0 : index
    %c0_10 = arith.constant 0 : index
    %12 = vector.load %arg5[%c0_9, %c0_10] : memref<128x128xbf16, #tpu.memory_space<vmem>>, vector<128x128xbf16>
    %cst_11 = arith.constant dense<0.000000e+00> : vector<16x128xf32>
    %13 = tpu.matmul %11, %12, %cst_11 {dimension_numbers = #tpu.dot_dimension_numbers<[1], [0], [0], [1], [0, 0, 1, 1], [], []>} : vector<16x128xbf16>, vector<128x128xbf16>, vector<16x128xf32> -> vector<16x128xf32>
    %c0_12 = arith.constant 0 : index
    %c0_13 = arith.constant 0 : index
    %14 = vector.load %arg1[%c0_12, %c0_13] : memref<16x16xbf16, #tpu.memory_space<vmem>>, vector<16x16xbf16>
    %15 = arith.truncf %13 : vector<16x128xf32> to vector<16x128xbf16>
    %cst_14 = arith.constant dense<0.000000e+00> : vector<16x128xf32>
    %16 = tpu.matmul %14, %15, %cst_14 {dimension_numbers = #tpu.dot_dimension_numbers<[1], [0], [0], [1], [0, 0, 1, 1], [], []>} : vector<16x16xbf16>, vector<16x128xbf16>, vector<16x128xf32> -> vector<16x128xf32>
    %c0_15 = arith.constant 0 : index
    %c0_16 = arith.constant 0 : index
    %17 = vector.load %arg6[%c0_15, %c0_16] : memref<1x128xf32, #tpu.memory_space<vmem>>, vector<1x128xf32>
    %18 = vector.broadcast %17 : vector<1x128xf32> to vector<16x128xf32>
    %19 = arith.addf %16, %18 : vector<16x128xf32>
    %c0_17 = arith.constant 0 : index
    %c0_18 = arith.constant 0 : index
    %20 = vector.load %arg7[%c0_17, %c0_18] : memref<16x128xf32, #tpu.memory_space<vmem>>, vector<16x128xf32>
    tpu.vector_store %arg7[%c0_17, %c0_18], %19 {strides = array<i32>} : memref<16x128xf32, #tpu.memory_space<vmem>>, vector<16x128xf32>,
    return
  }
  func.func @transform_0(%arg0: i32) -> (i32, i32) {
    %c0_i32 = arith.constant 0 : i32
    %c0_i32_0 = arith.constant 0 : i32
    %c0_i32_1 = arith.constant 0 : i32
    return %c0_i32, %c0_i32_0 : i32, i32
  }
  func.func @transform_1(%arg0: i32) -> (i32, i32) {
    %c0_i32 = arith.constant 0 : i32
    %c0_i32_0 = arith.constant 0 : i32
    %c0_i32_1 = arith.constant 0 : i32
    return %c0_i32, %c0_i32_0 : i32, i32
  }
  func.func @transform_2(%arg0: i32) -> (i32, i32) {
    %c0_i32 = arith.constant 0 : i32
    %c0_i32_0 = arith.constant 0 : i32
    %c0_i32_1 = arith.constant 0 : i32
    return %c0_i32, %c0_i32_0 : i32, i32
  }
  func.func @transform_3(%arg0: i32) -> (i32, i32) {
    %c0_i32 = arith.constant 0 : i32
    %c0_i32_0 = arith.constant 0 : i32
    %c0_i32_1 = arith.constant 0 : i32
    return %c0_i32, %c0_i32_0 : i32, i32
  }
  func.func @transform_4(%arg0: i32) -> (i32, i32) {
    %c0_i32 = arith.constant 0 : i32
    %c0_i32_0 = arith.constant 0 : i32
    %c0_i32_1 = arith.constant 0 : i32
    return %c0_i32, %c0_i32_0 : i32, i32
  }
  func.func @transform_5(%arg0: i32) -> (i32, i32) {
    %c0_i32 = arith.constant 0 : i32
    %c0_i32_0 = arith.constant 0 : i32
    %c0_i32_1 = arith.constant 0 : i32
    return %c0_i32, %c0_i32_0 : i32, i32
  }
  func.func @transform_6(%arg0: i32) -> (i32, i32) {
    %c0_i32 = arith.constant 0 : i32
    %c0_i32_0 = arith.constant 0 : i32
    %c0_i32_1 = arith.constant 0 : i32
    return %c0_i32, %c0_i32_0 : i32, i32
  }
}

</mosaic_0001>

<llo_original>
// kernel: tpu_custom_call.1
$region0: #{tpu_custom_call.1}
  #allocation0 [shape = 'u32[]', space=smem, size = 0x4, offset = 0x4, fixed_abs, tag = 'smem constant byte address 0x4 - core index']
  #allocation1 [shape = 'u32[144,128]{1,0:T(1,128)}', space=vmem, size = 0x12000, scoped, tag = 'internal scratch']
  %s0 = inlined_call_operand.hbm [shape: bf16[16,16], index: 0, kind: input, shape index: {}]
  %s1 = inlined_call_operand.hbm [shape: bf16[16,128], index: 1, kind: input, shape index: {}]
  %s2 = inlined_call_operand.hbm [shape: bf16[128,128], index: 2, kind: input, shape index: {}]
  %s3 = inlined_call_operand.vmem [shape: f32[1,128], index: 3, kind: input, shape index: {}]
  %s4 = inlined_call_operand.hbm [shape: bf16[128,128], index: 4, kind: input, shape index: {}]
  %s5 = inlined_call_operand.vmem [shape: f32[1,128], index: 5, kind: input, shape index: {}]
  %s6 = inlined_call_operand.hbm [shape: f32[16,128], index: 6, kind: output, shape index: {}]
  %s7 = sld [smem:[#allocation0]]
  $region50: #{tpu_custom_call.1} parent=0
    _
  %s9 = ssub.s32 1, %s7
  %s10 = scalar_select 0, %s9, %s7
  $region1: #{tpu_custom_call.1} parent=0
    #allocation2 [shape = 'u8[4096]{0}', space=vmem, size = 0x1000, scoped, tag = 'input window, operand 0, single buffered']
    #allocation3 [shape = 's32[1]{0}', space=sflag, size = 0x4, scoped, tag = 'scoped memory for tpu_custom_call.1']
    #allocation4 [shape = 's32[1]{0}', space=sflag, size = 0x4, scoped, tag = 'scoped memory for tpu_custom_call.1']
    #allocation5 [shape = 'u8[4096]{0}', space=vmem, size = 0x1000, scoped, tag = 'input window, operand 1, single buffered']
    #allocation6 [shape = 's32[1]{0}', space=sflag, size = 0x4, scoped, tag = 'scoped memory for tpu_custom_call.1']
    #allocation7 [shape = 'u8[32768]{0}', space=vmem, size = 0x8000, scoped, tag = 'input window, operand 2, single buffered']
    #allocation8 [shape = 'u8[32768]{0}', space=vmem, size = 0x8000, scoped, tag = 'input window, operand 4, single buffered']
    #allocation9 [shape = 's32[1]{0}', space=sflag, size = 0x4, scoped, tag = 'scoped memory for tpu_custom_call.1']
    #allocation10 [shape = 'u8[8192]{0}', space=vmem, size = 0x2000, scoped, tag = 'output window, operand 0, single buffered']
    %11 = vsyncpa [#allocation3], 0
    %12 = vsyncpa [#allocation6], 0
    %13 = vsyncpa [#allocation9], 0
    %14 = vsyncpa [#allocation4], 0
    // Predicated region
    $region2: #{tpu_custom_call.1} parent=1 // pred_check
      _
    $region3: #{tpu_custom_call.1} parent=1 // pred_check_branch
      %16 = sbr.rel (0) target = $region5
    $region4: #{tpu_custom_call.1} parent=1 // pred_region
      %s18 = ssub.s32 128, 128
      %19 = vsyncadd [#allocation3], %s18
      %s20 = sshll.u32 [#allocation2], 4
      %s21 = int_to_ptr.vmem [resolvable:$true] %s20
      %26 = dma.hbm_to_vmem [thread:$0]  %s0, 128, %s21, [#allocation3], 64, 64, 4
    $region5: #{tpu_custom_call.1} parent=1 // pred_fallthru
      _
    // Predicated region
    $region6: #{tpu_custom_call.1} parent=1 // pred_check
      _
    $region7: #{tpu_custom_call.1} parent=1 // pred_check_branch
      %28 = sbr.rel (0) target = $region9
    $region8: #{tpu_custom_call.1} parent=1 // pred_region
      %s30 = ssub.s32 128, 128
      %31 = vsyncadd [#allocation6], %s30
      %s32 = sshll.u32 [#allocation5], 4
      %s33 = int_to_ptr.vmem [resolvable:$true] %s32
      %38 = dma.hbm_to_vmem [thread:$0]  %s1, 128, %s33, [#allocation6], 64, 64, 4
    $region9: #{tpu_custom_call.1} parent=1 // pred_fallthru
      _
    // Predicated region
    $region10: #{tpu_custom_call.1} parent=1 // pred_check
      _
    $region11: #{tpu_custom_call.1} parent=1 // pred_check_branch
      %40 = sbr.rel (0) target = $region13
    $region12: #{tpu_custom_call.1} parent=1 // pred_region
      %s42 = ssub.s32 1024, 1024
      %43 = vsyncadd [#allocation6], %s42
      %s44 = sshll.u32 [#allocation7], 4
      %s45 = int_to_ptr.vmem [resolvable:$true] %s44
      %50 = dma.hbm_to_vmem [thread:$0]  %s2, 1024, %s45, [#allocation6], 64, 64, 4
    $region13: #{tpu_custom_call.1} parent=1 // pred_fallthru
      _
    // Predicated region
    $region14: #{tpu_custom_call.1} parent=1 // pred_check
      _
    $region15: #{tpu_custom_call.1} parent=1 // pred_check_branch
      %52 = sbr.rel (0) target = $region17
    $region16: #{tpu_custom_call.1} parent=1 // pred_region
      _
    $region17: #{tpu_custom_call.1} parent=1 // pred_fallthru
      _
    // Predicated region
    $region18: #{tpu_custom_call.1} parent=1 // pred_check
      _
    $region19: #{tpu_custom_call.1} parent=1 // pred_check_branch
      %54 = sbr.rel (0) target = $region21
    $region20: #{tpu_custom_call.1} parent=1 // pred_region
      %s56 = ssub.s32 1024, 1024
      %57 = vsyncadd [#allocation9], %s56
      %s58 = sshll.u32 [#allocation8], 4
      %s59 = int_to_ptr.vmem [resolvable:$true] %s58
      %64 = dma.hbm_to_vmem [thread:$0]  %s4, 1024, %s59, [#allocation9], 64, 64, 4
    $region21: #{tpu_custom_call.1} parent=1 // pred_fallthru
      _
    // Predicated region
    $region22: #{tpu_custom_call.1} parent=1 // pred_check
      _
    $region23: #{tpu_custom_call.1} parent=1 // pred_check_branch
      %66 = sbr.rel (0) target = $region25
    $region24: #{tpu_custom_call.1} parent=1 // pred_region
      _
    $region25: #{tpu_custom_call.1} parent=1 // pred_fallthru
      _
    // Predicated region
    $region26: #{tpu_custom_call.1} parent=1 // pred_check
      _
    $region27: #{tpu_custom_call.1} parent=1 // pred_check_branch
      %68 = sbr.rel (0) target = $region29
    $region28: #{tpu_custom_call.1} parent=1 // pred_region
      %69 = dma.done [#allocation3], 128
    $region29: #{tpu_custom_call.1} parent=1 // pred_fallthru
      _
    // Predicated region
    $region30: #{tpu_custom_call.1} parent=1 // pred_check
      _
    $region31: #{tpu_custom_call.1} parent=1 // pred_check_branch
      %71 = sbr.rel (0) target = $region33
    $region32: #{tpu_custom_call.1} parent=1 // pred_region
      %72 = dma.done [#allocation6], 128
    $region33: #{tpu_custom_call.1} parent=1 // pred_fallthru
      _
    // Predicated region
    $region34: #{tpu_custom_call.1} parent=1 // pred_check
      _
    $region35: #{tpu_custom_call.1} parent=1 // pred_check_branch
      %74 = sbr.rel (0) target = $region37
    $region36: #{tpu_custom_call.1} parent=1 // pred_region
      %75 = dma.done [#allocation6], 1024
    $region37: #{tpu_custom_call.1} parent=1 // pred_fallthru
      _
    // Predicated region
    $region38: #{tpu_custom_call.1} parent=1 // pred_check
      _
    $region39: #{tpu_custom_call.1} parent=1 // pred_check_branch
      %77 = sbr.rel (0) target = $region41
    $region40: #{tpu_custom_call.1} parent=1 // pred_region
      %78 = dma.done [#allocation9], 1024
    $region41: #{tpu_custom_call.1} parent=1 // pred_fallthru
      _
    %v80 = vld [vmem:[#allocation5] sm:$0xf]
    %v81 = vld [vmem:[#allocation5 + $0x4] sm:$0xf]
    %v82 = vld [vmem:[#allocation7] sm:$0xf]
    %v83 = vld [vmem:[#allocation7 + $0x4] sm:$0xf]
    %v84 = vld [vmem:[#allocation7 + $0x8] sm:$0xf]
    %v85 = vld [vmem:[#allocation7 + $0xc] sm:$0xf]
    %v86 = vld [vmem:[#allocation7 + $0x10] sm:$0xf]
    %v87 = vld [vmem:[#allocation7 + $0x14] sm:$0xf]
    %v88 = vld [vmem:[#allocation7 + $0x18] sm:$0xf]
    %v89 = vld [vmem:[#allocation7 + $0x1c] sm:$0xf]
    %v90 = vld [vmem:[#allocation7 + $0x20] sm:$0xf]
    %v91 = vld [vmem:[#allocation7 + $0x24] sm:$0xf]
    %v92 = vld [vmem:[#allocation7 + $0x28] sm:$0xf]
    %v93 = vld [vmem:[#allocation7 + $0x2c] sm:$0xf]
    %v94 = vld [vmem:[#allocation7 + $0x30] sm:$0xf]
    %v95 = vld [vmem:[#allocation7 + $0x34] sm:$0xf]
    %v96 = vld [vmem:[#allocation7 + $0x38] sm:$0xf]
    %v97 = vld [vmem:[#allocation7 + $0x3c] sm:$0xf]
    %v100 = vunpack.c.l.b16 %v80
    %v101 = vunpack.c.l.b16 %v81
    %v102 = vpack.c.b16 %v101, %v100
    %v120 = vunpack.c.l.b16 %v82
    %v121 = vunpack.c.l.b16 %v83
    %v122 = vunpack.c.l.b16 %v84
    %v123 = vunpack.c.l.b16 %v85
    %v124 = vunpack.c.l.b16 %v86
    %v125 = vunpack.c.l.b16 %v87
    %v126 = vunpack.c.l.b16 %v88
    %v127 = vunpack.c.l.b16 %v89
    %v128 = vunpack.c.l.b16 %v90
    %v129 = vunpack.c.l.b16 %v91
    %v130 = vunpack.c.l.b16 %v92
    %v131 = vunpack.c.l.b16 %v93
    %v132 = vunpack.c.l.b16 %v94
    %v133 = vunpack.c.l.b16 %v95
    %v134 = vunpack.c.l.b16 %v96
    %v135 = vunpack.c.l.b16 %v97
    %v136 = vpack.c.b16 %v121, %v120
    %v137 = vpack.c.b16 %v123, %v122
    %v138 = vpack.c.b16 %v125, %v124
    %v139 = vpack.c.b16 %v127, %v126
    %v140 = vpack.c.b16 %v129, %v128
    %v141 = vpack.c.b16 %v131, %v130
    %v142 = vpack.c.b16 %v133, %v132
    %v143 = vpack.c.b16 %v135, %v134
    %152 = vmatprep.subr.bf16.mxu0 0
    %153 = vmatpush1.bf16.msra.mxu0 %v143
    %154 = vmatprep.subr.bf16.mxu0 0
    %155 = vmatpush1.bf16.msra.mxu0 %v142
    %156 = vmatprep.subr.bf16.mxu0 0
    %157 = vmatpush1.bf16.msra.mxu0 %v141
    %158 = vmatprep.subr.bf16.mxu0 0
    %159 = vmatpush1.bf16.msra.mxu0 %v140
    %160 = vmatprep.subr.bf16.mxu0 0
    %161 = vmatpush1.bf16.msra.mxu0 %v139
    %162 = vmatprep.subr.bf16.mxu0 0
    %163 = vmatpush1.bf16.msra.mxu0 %v138
    %164 = vmatprep.subr.bf16.mxu0 0
    %165 = vmatpush1.bf16.msra.mxu0 %v137
    %166 = vmatprep.subr.bf16.mxu0 0
    %167 = vmatpush1.bf16.msra.mxu0 %v136
    %168 = vmatprep.subr.bf16.mxu0 0
    %169 = vmatpush2.bf16.msra.mxu0 0
    %170 = vmatprep.subr.bf16.mxu0 0
    %171 = vmatpush2.bf16.msra.mxu0 0
    %172 = vmatprep.subr.bf16.mxu0 0
    %173 = vmatpush2.bf16.msra.mxu0 0
    %174 = vmatprep.subr.bf16.mxu0 0
    %175 = vmatpush2.bf16.msra.mxu0 0
    %176 = vmatprep.subr.bf16.mxu0 0
    %177 = vmatpush2.bf16.msra.mxu0 0
    %178 = vmatprep.subr.bf16.mxu0 0
    %179 = vmatpush2.bf16.msra.mxu0 0
    %180 = vmatprep.subr.bf16.mxu0 0
    %181 = vmatpush2.bf16.msra.mxu0 0
    %182 = vmatprep.subr.bf16.mxu0 0
    %183 = vmatpush2.bf16.msra.mxu0 0
    %184 = vmatprep.mubr.bf16.mxu0 0
    %185 = vmatmul.mubr.bf16.gmra.mxu0 %v102
    %v186 = vpop.f32.mrf.mxu0
    %v187 = vadd.f32 0.0, %v186
    %v188 = vpop.f32.mrf.mxu0
    %v189 = vpop.f32.mrf.mxu0
    %v190 = vadd.f32 0.0, %v189
    %v191 = vpop.f32.mrf.mxu0
    %192 = vdwg.mxu0
    %v193 = vld [vmem:[#allocation2] sm:$0xf]
    %v194 = vld [vmem:[#allocation2 + $0x4] sm:$0xf]
    %v195 = vpack.c.bf16 %v190, %v187
    %v196 = vld [vmem:[%s3] sm:$0x1]
    %v198 = vlaneseq
    %v199 = vshrl.u32 %v198, 7
    %v200 = vsub.s32 0, %v199
    %v201 = vrot.slane %v196, %v200
    %v205 = vunpack.c.l.b16 %v193
    %v206 = vunpack.c.l.b16 %v194
    %v207 = vpack.c.b16 %v206, %v205
    %vm208 = vcmask 130048
    %v210 = vsel %vm208, %v207, 0
    %212 = vmatprep.subr.bf16.mxu0 0
    %213 = vmatpush1.bf16.msra.mxu0 0
    %214 = vmatprep.subr.bf16.mxu0 0
    %215 = vmatpush1.bf16.msra.mxu0 0
    %216 = vmatprep.subr.bf16.mxu0 0
    %217 = vmatpush1.bf16.msra.mxu0 0
    %218 = vmatprep.subr.bf16.mxu0 0
    %219 = vmatpush1.bf16.msra.mxu0 0
    %220 = vmatprep.subr.bf16.mxu0 0
    %221 = vmatpush1.bf16.msra.mxu0 0
    %222 = vmatprep.subr.bf16.mxu0 0
    %223 = vmatpush1.bf16.msra.mxu0 0
    %224 = vmatprep.subr.bf16.mxu0 0
    %225 = vmatpush1.bf16.msra.mxu0 0
    %226 = vmatprep.subr.bf16.mxu0 0
    %227 = vmatpush1.bf16.msra.mxu0 %v195
    %228 = vmatprep.subr.bf16.mxu0 0
    %229 = vmatpush2.bf16.msra.mxu0 0
    %230 = vmatprep.subr.bf16.mxu0 0
    %231 = vmatpush2.bf16.msra.mxu0 0
    %232 = vmatprep.subr.bf16.mxu0 0
    %233 = vmatpush2.bf16.msra.mxu0 0
    %234 = vmatprep.subr.bf16.mxu0 0
    %235 = vmatpush2.bf16.msra.mxu0 0
    %236 = vmatprep.subr.bf16.mxu0 0
    %237 = vmatpush2.bf16.msra.mxu0 0
    %238 = vmatprep.subr.bf16.mxu0 0
    %239 = vmatpush2.bf16.msra.mxu0 0
    %240 = vmatprep.subr.bf16.mxu0 0
    %241 = vmatpush2.bf16.msra.mxu0 0
    %242 = vmatprep.subr.bf16.mxu0 0
    %243 = vmatpush2.bf16.msra.mxu0 0
    %244 = vmatprep.mubr.bf16.mxu0 0
    %245 = vmatmul.mubr.bf16.gmra.mxu0 %v210
    %v246 = vpop.f32.mrf.mxu0
    %v247 = vadd.f32 %v201, %v246
    %v248 = vpop.f32.mrf.mxu0
    %v249 = vpop.f32.mrf.mxu0
    %v250 = vadd.f32 %v201, %v249
    %v251 = vpop.f32.mrf.mxu0
    %252 = vdwg.mxu0
    %v253 = vmax.f32 %v247, 0.0
    %v254 = vmax.f32 %v250, 0.0
    %v255 = vpack.c.bf16 %v254, %v253
    %v256 = vld [vmem:[#allocation8] sm:$0xf]
    %v257 = vld [vmem:[#allocation8 + $0x4] sm:$0xf]
    %v258 = vld [vmem:[#allocation8 + $0x8] sm:$0xf]
    %v259 = vld [vmem:[#allocation8 + $0xc] sm:$0xf]
    %v260 = vld [vmem:[#allocation8 + $0x10] sm:$0xf]
    %v261 = vld [vmem:[#allocation8 + $0x14] sm:$0xf]
    %v262 = vld [vmem:[#allocation8 + $0x18] sm:$0xf]
    %v263 = vld [vmem:[#allocation8 + $0x1c] sm:$0xf]
    %v264 = vld [vmem:[#allocation8 + $0x20] sm:$0xf]
    %v265 = vld [vmem:[#allocation8 + $0x24] sm:$0xf]
    %v266 = vld [vmem:[#allocation8 + $0x28] sm:$0xf]
    %v267 = vld [vmem:[#allocation8 + $0x2c] sm:$0xf]
    %v268 = vld [vmem:[#allocation8 + $0x30] sm:$0xf]
    %v269 = vld [vmem:[#allocation8 + $0x34] sm:$0xf]
    %v270 = vld [vmem:[#allocation8 + $0x38] sm:$0xf]
    %v271 = vld [vmem:[#allocation8 + $0x3c] sm:$0xf]
    %v288 = vunpack.c.l.b16 %v256
    %v289 = vunpack.c.l.b16 %v257
    %v290 = vunpack.c.l.b16 %v258
    %v291 = vunpack.c.l.b16 %v259
    %v292 = vunpack.c.l.b16 %v260
    %v293 = vunpack.c.l.b16 %v261
    %v294 = vunpack.c.l.b16 %v262
    %v295 = vunpack.c.l.b16 %v263
    %v296 = vunpack.c.l.b16 %v264
    %v297 = vunpack.c.l.b16 %v265
    %v298 = vunpack.c.l.b16 %v266
    %v299 = vunpack.c.l.b16 %v267
    %v300 = vunpack.c.l.b16 %v268
    %v301 = vunpack.c.l.b16 %v269
    %v302 = vunpack.c.l.b16 %v270
    %v303 = vunpack.c.l.b16 %v271
    %v304 = vpack.c.b16 %v289, %v288
    %v305 = vpack.c.b16 %v291, %v290
    %v306 = vpack.c.b16 %v293, %v292
    %v307 = vpack.c.b16 %v295, %v294
    %v308 = vpack.c.b16 %v297, %v296
    %v309 = vpack.c.b16 %v299, %v298
    %v310 = vpack.c.b16 %v301, %v300
    %v311 = vpack.c.b16 %v303, %v302
    %320 = vmatprep.subr.bf16.mxu0 0
    %321 = vmatpush1.bf16.msra.mxu0 %v311
    %322 = vmatprep.subr.bf16.mxu0 0
    %323 = vmatpush1.bf16.msra.mxu0 %v310
    %324 = vmatprep.subr.bf16.mxu0 0
    %325 = vmatpush1.bf16.msra.mxu0 %v309
    %326 = vmatprep.subr.bf16.mxu0 0
    %327 = vmatpush1.bf16.msra.mxu0 %v308
    %328 = vmatprep.subr.bf16.mxu0 0
    %329 = vmatpush1.bf16.msra.mxu0 %v307
    %330 = vmatprep.subr.bf16.mxu0 0
    %331 = vmatpush1.bf16.msra.mxu0 %v306
    %332 = vmatprep.subr.bf16.mxu0 0
    %333 = vmatpush1.bf16.msra.mxu0 %v305
    %334 = vmatprep.subr.bf16.mxu0 0
    %335 = vmatpush1.bf16.msra.mxu0 %v304
    %336 = vmatprep.subr.bf16.mxu0 0
    %337 = vmatpush2.bf16.msra.mxu0 0
    %338 = vmatprep.subr.bf16.mxu0 0
    %339 = vmatpush2.bf16.msra.mxu0 0
    %340 = vmatprep.subr.bf16.mxu0 0
    %341 = vmatpush2.bf16.msra.mxu0 0
    %342 = vmatprep.subr.bf16.mxu0 0
    %343 = vmatpush2.bf16.msra.mxu0 0
    %344 = vmatprep.subr.bf16.mxu0 0
    %345 = vmatpush2.bf16.msra.mxu0 0
    %346 = vmatprep.subr.bf16.mxu0 0
    %347 = vmatpush2.bf16.msra.mxu0 0
    %348 = vmatprep.subr.bf16.mxu0 0
    %349 = vmatpush2.bf16.msra.mxu0 0
    %350 = vmatprep.subr.bf16.mxu0 0
    %351 = vmatpush2.bf16.msra.mxu0 0
    %352 = vmatprep.mubr.bf16.mxu0 0
    %353 = vmatmul.mubr.bf16.gmra.mxu0 %v255
    %v354 = vpop.f32.mrf.mxu0
    %v355 = vadd.f32 0.0, %v354
    %v356 = vpop.f32.mrf.mxu0
    %v357 = vpop.f32.mrf.mxu0
    %v358 = vadd.f32 0.0, %v357
    %v359 = vpop.f32.mrf.mxu0
    %360 = vdwg.mxu0
    %v361 = vpack.c.bf16 %v358, %v355
    %v362 = vld [vmem:[%s5] sm:$0x1]
    %v364 = vlaneseq
    %v365 = vshrl.u32 %v364, 7
    %v366 = vsub.s32 0, %v365
    %v367 = vrot.slane %v362, %v366
    %369 = vmatprep.subr.bf16.mxu0 0
    %370 = vmatpush1.bf16.msra.mxu0 0
    %371 = vmatprep.subr.bf16.mxu0 0
    %372 = vmatpush1.bf16.msra.mxu0 0
    %373 = vmatprep.subr.bf16.mxu0 0
    %374 = vmatpush1.bf16.msra.mxu0 0
    %375 = vmatprep.subr.bf16.mxu0 0
    %376 = vmatpush1.bf16.msra.mxu0 0
    %377 = vmatprep.subr.bf16.mxu0 0
    %378 = vmatpush1.bf16.msra.mxu0 0
    %379 = vmatprep.subr.bf16.mxu0 0
    %380 = vmatpush1.bf16.msra.mxu0 0
    %381 = vmatprep.subr.bf16.mxu0 0
    %382 = vmatpush1.bf16.msra.mxu0 0
    %383 = vmatprep.subr.bf16.mxu0 0
    %384 = vmatpush1.bf16.msra.mxu0 %v361
    %385 = vmatprep.subr.bf16.mxu0 0
    %386 = vmatpush2.bf16.msra.mxu0 0
    %387 = vmatprep.subr.bf16.mxu0 0
    %388 = vmatpush2.bf16.msra.mxu0 0
    %389 = vmatprep.subr.bf16.mxu0 0
    %390 = vmatpush2.bf16.msra.mxu0 0
    %391 = vmatprep.subr.bf16.mxu0 0
    %392 = vmatpush2.bf16.msra.mxu0 0
    %393 = vmatprep.subr.bf16.mxu0 0
    %394 = vmatpush2.bf16.msra.mxu0 0
    %395 = vmatprep.subr.bf16.mxu0 0
    %396 = vmatpush2.bf16.msra.mxu0 0
    %397 = vmatprep.subr.bf16.mxu0 0
    %398 = vmatpush2.bf16.msra.mxu0 0
    %399 = vmatprep.subr.bf16.mxu0 0
    %400 = vmatpush2.bf16.msra.mxu0 0
    %401 = vmatprep.mubr.bf16.mxu0 0
    %402 = vmatmul.mubr.bf16.gmra.mxu0 %v210
    %v403 = vpop.f32.mrf.mxu0
    %v404 = vadd.f32 %v367, %v403
    %v405 = vpop.f32.mrf.mxu0
    %v406 = vpop.f32.mrf.mxu0
    %v407 = vadd.f32 %v367, %v406
    %v408 = vpop.f32.mrf.mxu0
    %409 = vdwg.mxu0
    %410 = vst [vmem:[#allocation10] sm:$0xff] %v404
    %411 = vst [vmem:[#allocation10 + $0x8] sm:$0xff] %v407
    // Predicated region
    $region42: #{tpu_custom_call.1} parent=1 // pred_check
      _
    $region43: #{tpu_custom_call.1} parent=1 // pred_check_branch
      %413 = sbr.rel (0) target = $region45
    $region44: #{tpu_custom_call.1} parent=1 // pred_region
      %s415 = ssub.s32 256, 256
      %416 = vsyncadd [#allocation4], %s415
      %s417 = sshll.u32 [#allocation10], 4
      %s418 = int_to_ptr.vmem [resolvable:$true] %s417
      %423 = dma.vmem_to_hbm [thread:$0]  %s418, 256, %s6, [#allocation4], 128, 128, 8
    $region45: #{tpu_custom_call.1} parent=1 // pred_fallthru
      _
    // Predicated region
    $region46: #{tpu_custom_call.1} parent=1 // pred_check
      _
    $region47: #{tpu_custom_call.1} parent=1 // pred_check_branch
      %425 = sbr.rel (0) target = $region49
    $region48: #{tpu_custom_call.1} parent=1 // pred_region
      %426 = dma.done [#allocation4], 256
    $region49: #{tpu_custom_call.1} parent=1 // pred_fallthru
      _
    %427 = vsyncpa [#allocation3], 1
    %428 = vsyncpa [#allocation6], 1
    %429 = vsyncpa [#allocation9], 1
    %430 = vsyncpa [#allocation4], 1

</llo_original>
